<compile_context>
chip_gen: v7x
topology: tpu7x:2x2x1
jax: 0.10.0
libtpu: 0.0.40
codegen_flags: <defaults>
</compile_context>

<pallas_src>
import jax
import jax.numpy as jnp
from jax.experimental import pallas as pl
from jax.experimental.pallas import tpu as pltpu

HIDDEN = 64              # nn.Linear(state_dim, 64)
SINGLE_TILE_MAX = 2048   # one grid step (TB = B, no padding) up to this batch
LARGE_TILE = 1024        # target tile rows for very large batches


def _round_up(n: int, m: int) -> int:
    return ((n + m - 1) // m) * m


def policy_kernel(x_ref, w1_ref, b1_ref, w2_ref, b2_ref, o_ref):
    # fc1: x @ W1 + b1, ReLU   (MXU matmul + VPU elementwise)
    x = x_ref[...]
    h = jnp.dot(x, w1_ref[...], preferred_element_type=jnp.float32) + b1_ref[...]
    h = jnp.maximum(h, 0.0)

    # fc2: h @ W2 + b2 -> (TB, action_dim) logits (compact, no lane padding)
    logits = jnp.dot(h, w2_ref[...], preferred_element_type=jnp.float32) + b2_ref[...]

    # Numerically stable softmax along the action axis.
    m = jnp.max(logits, axis=-1, keepdims=True)
    e = jnp.exp(logits - m)
    denom = jnp.sum(e, axis=-1, keepdims=True)
    o_ref[...] = e * pl.reciprocal(denom, approx=False)


@jax.jit
def policy_forward(x, w1, b1, w2, b2):
    """Action probabilities.

    x : (B, state_dim) f32
    w1: (state_dim, hidden) f32   -- transpose of PyTorch fc1.weight
    b1: (1, hidden) f32
    w2: (hidden, action_dim) f32  -- transpose of PyTorch fc2.weight
    b2: (1, action_dim) f32
    returns (B, action_dim) f32 probabilities (rows sum to 1).
    """
    B, state_dim = x.shape
    hidden, action_dim = w2.shape

    # Batch tiling: single grid step (no row padding) for typical RL batches;
    # very large batches use ~1024-row tiles sized to avoid 2x row padding.
    if B <= SINGLE_TILE_MAX:
        TB, B_pad = B, B
    else:
        n_tiles = -(-B // LARGE_TILE)
        TB = _round_up(-(-B // n_tiles), 8)
        B_pad = n_tiles * TB
    xp = x if B_pad == B else jnp.pad(x, ((0, B_pad - B), (0, 0)))
    grid = (B_pad // TB,)

    out = pl.pallas_call(
        policy_kernel,
        out_shape=jax.ShapeDtypeStruct((B_pad, action_dim), jnp.float32),
        grid=grid,
        in_specs=[
            pl.BlockSpec((TB, state_dim), lambda i: (i, 0)),       # x tile (pipelined)
            pl.BlockSpec((state_dim, hidden), lambda i: (0, 0)),   # W1 (VMEM-resident)
            pl.BlockSpec((1, hidden), lambda i: (0, 0)),           # b1 (VMEM-resident)
            pl.BlockSpec((hidden, action_dim), lambda i: (0, 0)),  # W2 (VMEM-resident)
            pl.BlockSpec((1, action_dim), lambda i: (0, 0)),       # b2 (VMEM-resident)
        ],
        out_specs=pl.BlockSpec((TB, action_dim), lambda i: (i, 0)),
        compiler_params=pltpu.CompilerParams(
            # v7x: let the two TensorCores split batch tiles when there are >= 2
            # (no-op on v5e/v6e); single-step grids stay "arbitrary".
            dimension_semantics=("parallel",) if grid[0] > 1 else ("arbitrary",),
            vmem_limit_bytes=8 << 20,
        ),
    )(xp, w1, b1, w2, b2)

    return out if B_pad == B else out[:B]


def init_params(key, state_dim, action_dim, hidden=HIDDEN):
    """Deterministic synthetic parameters (PyTorch-like uniform fan-in init).

    Built once, already in kernel layout (weights (in, out), biases (1, out)):
    nothing is padded or reshaped per forward call.
    """
    k1, k2, k3, k4 = jax.random.split(key, 4)
    bound1 = 1.0 / jnp.sqrt(state_dim)
    bound2 = 1.0 / jnp.sqrt(hidden)
    w1 = jax.random.uniform(k1, (state_dim, hidden), jnp.float32, -bound1, bound1)
    b1 = jax.random.uniform(k2, (1, hidden), jnp.float32, -bound1, bound1)
    w2 = jax.random.uniform(k3, (hidden, action_dim), jnp.float32, -bound2, bound2)
    b2 = jax.random.uniform(k4, (1, action_dim), jnp.float32, -bound2, bound2)
    return w1, b1, w2, b2


if __name__ == "__main__":
    key = jax.random.PRNGKey(0)
    state_dim, action_dim, batch = 4, 2, 8  # CartPole-like dims

    kx, kp = jax.random.split(key)
    x = jax.random.normal(kx, (batch, state_dim), dtype=jnp.float32)
    w1, b1, w2, b2 = init_params(kp, state_dim, action_dim)

    probs = policy_forward(x, w1, b1, w2, b2)
    probs = jax.block_until_ready(probs)

    # Pure-JAX reference check.
    h_ref = jnp.maximum(x @ w1 + b1, 0.0)
    probs_ref = jax.nn.softmax(h_ref @ w2 + b2, axis=-1)
    assert probs.shape == (batch, action_dim), "bad output shape"
    assert jnp.allclose(probs, probs_ref, atol=1e-5), "mismatch vs reference"
    assert jnp.allclose(jnp.sum(probs, axis=-1), 1.0, atol=1e-5), "probs must sum to 1"

    # TODO(synk): select_action (Categorical sampling / log_prob) is host-side
    # control logic in the PyTorch module and is not part of the kernel.
    print("KERNEL_OK")
</pallas_src>

<mosaic_0001>
module attributes {stable_mosaic.version = 11 : i64} {
  func.func @policy_kernel(%arg0: i32, %arg1: memref<8x4xf32, #tpu.memory_space<vmem>>, %arg2: memref<4x64xf32, #tpu.memory_space<vmem>>, %arg3: memref<1x64xf32, #tpu.memory_space<vmem>>, %arg4: memref<64x2xf32, #tpu.memory_space<vmem>>, %arg5: memref<1x2xf32, #tpu.memory_space<vmem>>, %arg6: memref<8x2xf32, #tpu.memory_space<vmem>>) attributes {dimension_semantics = [#tpu.dimension_semantics<arbitrary>], iteration_bounds = array<i64: 1>, scalar_prefetch = 0 : i64, scratch_operands = 0 : i64, tpu.core_type = #tpu.core_type<tc>, window_params = [{transform_indices = @transform_0, window_bounds = array<i64: 8, 4>}, {pipeline_mode = #tpu.pipeline_mode<synchronous>, transform_indices = @transform_1, window_bounds = array<i64: 4, 64>}, {pipeline_mode = #tpu.pipeline_mode<synchronous>, transform_indices = @transform_2, window_bounds = array<i64: 1, 64>}, {pipeline_mode = #tpu.pipeline_mode<synchronous>, transform_indices = @transform_3, window_bounds = array<i64: 64, 2>}, {pipeline_mode = #tpu.pipeline_mode<synchronous>, transform_indices = @transform_4, window_bounds = array<i64: 1, 2>}, {transform_indices = @transform_5, window_bounds = array<i64: 8, 2>}]} {
    %c0 = arith.constant 0 : index
    %c0_0 = arith.constant 0 : index
    %0 = vector.load %arg1[%c0, %c0_0] : memref<8x4xf32, #tpu.memory_space<vmem>>, vector<8x4xf32>
    %c0_1 = arith.constant 0 : index
    %c0_2 = arith.constant 0 : index
    %1 = vector.load %arg2[%c0_1, %c0_2] : memref<4x64xf32, #tpu.memory_space<vmem>>, vector<4x64xf32>
    %cst = arith.constant dense<0.000000e+00> : vector<8x64xf32>
    %2 = tpu.matmul %0, %1, %cst {dimension_numbers = #tpu.dot_dimension_numbers<[1], [0], [0], [1], [0, 0, 1, 1], [], []>} : vector<8x4xf32>, vector<4x64xf32>, vector<8x64xf32> -> vector<8x64xf32>
    %c0_3 = arith.constant 0 : index
    %c0_4 = arith.constant 0 : index
    %3 = vector.load %arg3[%c0_3, %c0_4] : memref<1x64xf32, #tpu.memory_space<vmem>>, vector<1x64xf32>
    %4 = vector.broadcast %3 : vector<1x64xf32> to vector<8x64xf32>
    %5 = arith.addf %2, %4 : vector<8x64xf32>
    %cst_5 = arith.constant 0.000000e+00 : f32
    %6 = vector.broadcast %cst_5 : f32 to vector<8x64xf32>
    %7 = arith.maximumf %5, %6 : vector<8x64xf32>
    %c0_6 = arith.constant 0 : index
    %c0_7 = arith.constant 0 : index
    %8 = vector.load %arg4[%c0_6, %c0_7] : memref<64x2xf32, #tpu.memory_space<vmem>>, vector<64x2xf32>
    %cst_8 = arith.constant dense<0.000000e+00> : vector<8x2xf32>
    %9 = tpu.matmul %7, %8, %cst_8 {dimension_numbers = #tpu.dot_dimension_numbers<[1], [0], [0], [1], [0, 0, 1, 1], [], []>} : vector<8x64xf32>, vector<64x2xf32>, vector<8x2xf32> -> vector<8x2xf32>
    %c0_9 = arith.constant 0 : index
    %c0_10 = arith.constant 0 : index
    %10 = vector.load %arg5[%c0_9, %c0_10] : memref<1x2xf32, #tpu.memory_space<vmem>>, vector<1x2xf32>
    %11 = vector.broadcast %10 : vector<1x2xf32> to vector<8x2xf32>
    %12 = arith.addf %9, %11 : vector<8x2xf32>
    %cst_11 = arith.constant dense<0xFF800000> : vector<8xf32>
    %13 = vector.multi_reduction <maximumf>, %12, %cst_11 [1] : vector<8x2xf32> to vector<8xf32>
    %14 = vector.shape_cast %13 : vector<8xf32> to vector<8x1xf32>
    %15 = vector.broadcast %14 : vector<8x1xf32> to vector<8x2xf32>
    %16 = arith.subf %12, %15 : vector<8x2xf32>
    %17 = math.exp %16 : vector<8x2xf32>
    %cst_12 = arith.constant dense<0.000000e+00> : vector<8xf32>
    %18 = vector.multi_reduction <add>, %17, %cst_12 [1] : vector<8x2xf32> to vector<8xf32>
    %19 = vector.shape_cast %18 : vector<8xf32> to vector<8x1xf32>
    %20 = tpu.reciprocal %19 : vector<8x1xf32> -> vector<8x1xf32>
    %21 = vector.broadcast %20 : vector<8x1xf32> to vector<8x2xf32>
    %22 = arith.mulf %17, %21 : vector<8x2xf32>
    %c0_13 = arith.constant 0 : index
    %c0_14 = arith.constant 0 : index
    %23 = vector.load %arg6[%c0_13, %c0_14] : memref<8x2xf32, #tpu.memory_space<vmem>>, vector<8x2xf32>
    tpu.vector_store %arg6[%c0_13, %c0_14], %22 {strides = array<i32>} : memref<8x2xf32, #tpu.memory_space<vmem>>, vector<8x2xf32>,
    return
  }
  func.func @transform_0(%arg0: i32) -> (i32, i32) {
    %c0_i32 = arith.constant 0 : i32
    %c0_i32_0 = arith.constant 0 : i32
    return %arg0, %c0_i32 : i32, i32
  }
  func.func @transform_1(%arg0: i32) -> (i32, i32) {
    %c0_i32 = arith.constant 0 : i32
    %c0_i32_0 = arith.constant 0 : i32
    %c0_i32_1 = arith.constant 0 : i32
    return %c0_i32, %c0_i32_0 : i32, i32
  }
  func.func @transform_2(%arg0: i32) -> (i32, i32) {
    %c0_i32 = arith.constant 0 : i32
    %c0_i32_0 = arith.constant 0 : i32
    %c0_i32_1 = arith.constant 0 : i32
    return %c0_i32, %c0_i32_0 : i32, i32
  }
  func.func @transform_3(%arg0: i32) -> (i32, i32) {
    %c0_i32 = arith.constant 0 : i32
    %c0_i32_0 = arith.constant 0 : i32
    %c0_i32_1 = arith.constant 0 : i32
    return %c0_i32, %c0_i32_0 : i32, i32
  }
  func.func @transform_4(%arg0: i32) -> (i32, i32) {
    %c0_i32 = arith.constant 0 : i32
    %c0_i32_0 = arith.constant 0 : i32
    %c0_i32_1 = arith.constant 0 : i32
    return %c0_i32, %c0_i32_0 : i32, i32
  }
  func.func @transform_5(%arg0: i32) -> (i32, i32) {
    %c0_i32 = arith.constant 0 : i32
    %c0_i32_0 = arith.constant 0 : i32
    return %arg0, %c0_i32 : i32, i32
  }
}

</mosaic_0001>

<llo_original>
// kernel: policy_forward.1
$region0: #{policy_forward.1}
  #allocation0 [shape = 'u32[]', space=smem, size = 0x4, offset = 0x4, fixed_abs, tag = 'smem constant byte address 0x4 - core index']
  #allocation1 [shape = 'u32[144,128]{1,0:T(1,128)}', space=vmem, size = 0x12000, scoped, tag = 'internal scratch']
  %s0 = inlined_call_operand.vmem [shape: f32[8,4], index: 0, kind: input, shape index: {}]
  %s1 = inlined_call_operand.vmem [shape: f32[4,64], index: 1, kind: input, shape index: {}]
  %s2 = inlined_call_operand.vmem [shape: f32[1,64], index: 2, kind: input, shape index: {}]
  %s3 = inlined_call_operand.vmem [shape: f32[64,2], index: 3, kind: input, shape index: {}]
  %s4 = inlined_call_operand.vmem [shape: f32[1,2], index: 4, kind: input, shape index: {}]
  %s5 = inlined_call_operand.vmem [shape: f32[8,2], index: 5, kind: output, shape index: {}]
  %s6 = sld [smem:[#allocation0]]
  $region30: #{policy_forward.1} parent=0
    _
  %s8 = ssub.s32 1, %s6
  %s9 = scalar_select 0, %s8, %s6
  // Predicated region
  $region2: #{policy_forward.1} parent=0 // pred_check
    _
  $region3: #{policy_forward.1} parent=0 // pred_check_branch
    %11 = sbr.rel (0) target = $region5
  $region4: #{policy_forward.1} parent=0 // pred_region
    _
  $region5: #{policy_forward.1} parent=0 // pred_fallthru
    _
  // Predicated region
  $region6: #{policy_forward.1} parent=0 // pred_check
    _
  $region7: #{policy_forward.1} parent=0 // pred_check_branch
    %13 = sbr.rel (0) target = $region9
  $region8: #{policy_forward.1} parent=0 // pred_region
    _
  $region9: #{policy_forward.1} parent=0 // pred_fallthru
    _
  // Predicated region
  $region10: #{policy_forward.1} parent=0 // pred_check
    _
  $region11: #{policy_forward.1} parent=0 // pred_check_branch
    %15 = sbr.rel (0) target = $region13
  $region12: #{policy_forward.1} parent=0 // pred_region
    _
  $region13: #{policy_forward.1} parent=0 // pred_fallthru
    _
  // Predicated region
  $region14: #{policy_forward.1} parent=0 // pred_check
    _
  $region15: #{policy_forward.1} parent=0 // pred_check_branch
    %17 = sbr.rel (0) target = $region17
  $region16: #{policy_forward.1} parent=0 // pred_region
    _
  $region17: #{policy_forward.1} parent=0 // pred_fallthru
    _
  // Predicated region
  $region18: #{policy_forward.1} parent=0 // pred_check
    _
  $region19: #{policy_forward.1} parent=0 // pred_check_branch
    %19 = sbr.rel (0) target = $region21
  $region20: #{policy_forward.1} parent=0 // pred_region
    _
  $region21: #{policy_forward.1} parent=0 // pred_fallthru
    _
  %v20 = vld [vmem:[%s0] sm:$0xff]
  %v21 = vld [vmem:[%s1] sm:$0xf]
  %v22 = vld [vmem:[%s2] sm:$0x1]
  %v24 = vlaneseq
  %v25 = vshrl.u32 %v24, 7
  %v26 = vsub.s32 0, %v25
  %v27 = vrot.slane %v22, %v26
  %vm29 = vcmask 31744
  %v31 = vsel %vm29, %v20, 0
  %vm33 = vcmask 1043456
  %v35 = vsel %vm33, %v21, 0
  %37 = vmatprep.subr.mxu0 0.0
  %38 = vmatpush1.msra.mxu0 %v35
  %39 = vmatprep.subr.mxu0 0.0
  %40 = vmatpush1.msra.mxu0 0.0
  %41 = vmatprep.subr.mxu0 0.0
  %42 = vmatpush1.msra.mxu0 0.0
  %43 = vmatprep.subr.mxu0 0.0
  %44 = vmatpush1.msra.mxu0 0.0
  %45 = vmatprep.subr.mxu0 0.0
  %46 = vmatpush1.msra.mxu0 0.0
  %47 = vmatprep.subr.mxu0 0.0
  %48 = vmatpush1.msra.mxu0 0.0
  %49 = vmatprep.subr.mxu0 0.0
  %50 = vmatpush1.msra.mxu0 0.0
  %51 = vmatprep.subr.mxu0 0.0
  %52 = vmatpush1.msra.mxu0 0.0
  %53 = vmatprep.subr.mxu0 0.0
  %54 = vmatpush1.msra.mxu0 0.0
  %55 = vmatprep.subr.mxu0 0.0
  %56 = vmatpush1.msra.mxu0 0.0
  %57 = vmatprep.subr.mxu0 0.0
  %58 = vmatpush1.msra.mxu0 0.0
  %59 = vmatprep.subr.mxu0 0.0
  %60 = vmatpush1.msra.mxu0 0.0
  %61 = vmatprep.subr.mxu0 0.0
  %62 = vmatpush1.msra.mxu0 0.0
  %63 = vmatprep.subr.mxu0 0.0
  %64 = vmatpush1.msra.mxu0 0.0
  %65 = vmatprep.subr.mxu0 0.0
  %66 = vmatpush1.msra.mxu0 0.0
  %67 = vmatprep.subr.mxu0 0.0
  %68 = vmatpush1.msra.mxu0 0.0
  %69 = vmatprep.subr.mxu0 0.0
  %70 = vmatpush1.msra.mxu0 0.0
  %71 = vmatprep.subr.mxu0 0.0
  %72 = vmatpush1.msra.mxu0 0.0
  %73 = vmatprep.subr.mxu0 0.0
  %74 = vmatpush1.msra.mxu0 0.0
  %75 = vmatprep.subr.mxu0 0.0
  %76 = vmatpush1.msra.mxu0 0.0
  %77 = vmatprep.subr.mxu0 0.0
  %78 = vmatpush1.msra.mxu0 0.0
  %79 = vmatprep.subr.mxu0 0.0
  %80 = vmatpush1.msra.mxu0 0.0
  %81 = vmatprep.subr.mxu0 0.0
  %82 = vmatpush1.msra.mxu0 0.0
  %83 = vmatprep.subr.mxu0 0.0
  %84 = vmatpush1.msra.mxu0 0.0
  %85 = vmatprep.subr.mxu0 0.0
  %86 = vmatpush1.msra.mxu0 0.0
  %87 = vmatprep.subr.mxu0 0.0
  %88 = vmatpush1.msra.mxu0 0.0
  %89 = vmatprep.subr.mxu0 0.0
  %90 = vmatpush1.msra.mxu0 0.0
  %91 = vmatprep.subr.mxu0 0.0
  %92 = vmatpush1.msra.mxu0 0.0
  %93 = vmatprep.subr.mxu0 0.0
  %94 = vmatpush1.msra.mxu0 0.0
  %95 = vmatprep.subr.mxu0 0.0
  %96 = vmatpush1.msra.mxu0 0.0
  %97 = vmatprep.subr.mxu0 0.0
  %98 = vmatpush1.msra.mxu0 0.0
  %99 = vmatprep.subr.mxu0 0.0
  %100 = vmatpush1.msra.mxu0 0.0
  %101 = vmatprep.mubr.f32.mxu0 0.0
  %102 = vmatmul.mubr.f32.gmra.mrb[0].mxu0 %v31
  %v103 = vpop.f32.mrb[0].mxu0
  %v104 = vadd.f32 %v27, %v103
  %v105 = vpop.f32.mrb[0].mxu0
  %106 = vdwg.mxu0
  %v107 = vmax.f32 %v104, 0.0
  %v108 = vld [vmem:[%s3] sm:$0xff]
  %v109 = vld [vmem:[%s3 + $0x8] sm:$0xff]
  %v110 = vld [vmem:[%s3 + $0x10] sm:$0xff]
  %v111 = vld [vmem:[%s3 + $0x18] sm:$0xff]
  %v112 = vld [vmem:[%s3 + $0x20] sm:$0xff]
  %v113 = vld [vmem:[%s3 + $0x28] sm:$0xff]
  %v114 = vld [vmem:[%s3 + $0x30] sm:$0xff]
  %v115 = vld [vmem:[%s3 + $0x38] sm:$0xff]
  %v116 = vld [vmem:[%s4] sm:$0x1]
  %v118 = vlaneseq
  %v119 = vshrl.u32 %v118, 7
  %v120 = vsub.s32 0, %v119
  %v121 = vrot.slane %v116, %v120
  %vm123 = vcmask 523264
  %v125 = vsel %vm123, %v107, 0
  %127 = vmatprep.subr.mxu0 0.0
  %128 = vmatpush1.msra.mxu0 %v108
  %129 = vmatprep.subr.mxu0 0.0
  %130 = vmatpush1.msra.mxu0 %v109
  %131 = vmatprep.subr.mxu0 0.0
  %132 = vmatpush1.msra.mxu0 %v110
  %133 = vmatprep.subr.mxu0 0.0
  %134 = vmatpush1.msra.mxu0 %v111
  %135 = vmatprep.subr.mxu0 0.0
  %136 = vmatpush1.msra.mxu0 %v112
  %137 = vmatprep.subr.mxu0 0.0
  %138 = vmatpush1.msra.mxu0 %v113
  %139 = vmatprep.subr.mxu0 0.0
  %140 = vmatpush1.msra.mxu0 %v114
  %141 = vmatprep.subr.mxu0 0.0
  %142 = vmatpush1.msra.mxu0 %v115
  %143 = vmatprep.subr.mxu0 0.0
  %144 = vmatpush1.msra.mxu0 0.0
  %145 = vmatprep.subr.mxu0 0.0
  %146 = vmatpush1.msra.mxu0 0.0
  %147 = vmatprep.subr.mxu0 0.0
  %148 = vmatpush1.msra.mxu0 0.0
  %149 = vmatprep.subr.mxu0 0.0
  %150 = vmatpush1.msra.mxu0 0.0
  %151 = vmatprep.subr.mxu0 0.0
  %152 = vmatpush1.msra.mxu0 0.0
  %153 = vmatprep.subr.mxu0 0.0
  %154 = vmatpush1.msra.mxu0 0.0
  %155 = vmatprep.subr.mxu0 0.0
  %156 = vmatpush1.msra.mxu0 0.0
  %157 = vmatprep.subr.mxu0 0.0
  %158 = vmatpush1.msra.mxu0 0.0
  %159 = vmatprep.subr.mxu0 0.0
  %160 = vmatpush1.msra.mxu0 0.0
  %161 = vmatprep.subr.mxu0 0.0
  %162 = vmatpush1.msra.mxu0 0.0
  %163 = vmatprep.subr.mxu0 0.0
  %164 = vmatpush1.msra.mxu0 0.0
  %165 = vmatprep.subr.mxu0 0.0
  %166 = vmatpush1.msra.mxu0 0.0
  %167 = vmatprep.subr.mxu0 0.0
  %168 = vmatpush1.msra.mxu0 0.0
  %169 = vmatprep.subr.mxu0 0.0
  %170 = vmatpush1.msra.mxu0 0.0
  %171 = vmatprep.subr.mxu0 0.0
  %172 = vmatpush1.msra.mxu0 0.0
  %173 = vmatprep.subr.mxu0 0.0
  %174 = vmatpush1.msra.mxu0 0.0
  %175 = vmatprep.subr.mxu0 0.0
  %176 = vmatpush1.msra.mxu0 0.0
  %177 = vmatprep.subr.mxu0 0.0
  %178 = vmatpush1.msra.mxu0 0.0
  %179 = vmatprep.subr.mxu0 0.0
  %180 = vmatpush1.msra.mxu0 0.0
  %181 = vmatprep.subr.mxu0 0.0
  %182 = vmatpush1.msra.mxu0 0.0
  %183 = vmatprep.subr.mxu0 0.0
  %184 = vmatpush1.msra.mxu0 0.0
  %185 = vmatprep.subr.mxu0 0.0
  %186 = vmatpush1.msra.mxu0 0.0
  %187 = vmatprep.subr.mxu0 0.0
  %188 = vmatpush1.msra.mxu0 0.0
  %189 = vmatprep.subr.mxu0 0.0
  %190 = vmatpush1.msra.mxu0 0.0
  %191 = vmatprep.mubr.f32.mxu0 0.0
  %192 = vmatmul.mubr.f32.gmra.mrb[0].mxu0 %v125
  %v193 = vpop.f32.mrb[0].mxu0
  %v194 = vadd.f32 %v121, %v193
  %v195 = vpop.f32.mrb[0].mxu0
  %196 = vdwg.mxu0
  %vm197 = vcmask 15360
  %v198 = vsel %vm197, %v194, -inf
  %199 = vmax.xlane.f32.xlu0 %v198
  %v200 = vpop.xlane.xlu0 %199
  %v201 = vsub.f32 %v194, %v200
  %v202 = vmul.f32 %v201, 1.442695
  %v203 = vpow.pop %v202
  %v204 = vsel %vm197, %v203, 0.0
  %205 = vadd.xlane.f32.xlu0 %v204
  %v206 = vpop.xlane.xlu0 %205
  %v207 = vrcp.pop %v206
  %v208 = vmul.f32 %v203, %v207
  %209 = vst.msk [vmem:[%s5] sm:$0xff] %vm197, %v208
  // Predicated region
  $region22: #{policy_forward.1} parent=0 // pred_check
    _
  $region23: #{policy_forward.1} parent=0 // pred_check_branch
    %211 = sbr.rel (0) target = $region25
  $region24: #{policy_forward.1} parent=0 // pred_region
    _
  $region25: #{policy_forward.1} parent=0 // pred_fallthru
    _
  // Predicated region
  $region26: #{policy_forward.1} parent=0 // pred_check
    _
  $region27: #{policy_forward.1} parent=0 // pred_check_branch
    %213 = sbr.rel (0) target = $region29
  $region28: #{policy_forward.1} parent=0 // pred_region
    _
  $region29: #{policy_forward.1} parent=0 // pred_fallthru
    _

</llo_original>
